<compile_context>
chip_gen: v6e
topology: v6e:2x2x1
jax: 0.10.0
libtpu: 0.0.40
codegen_flags: <defaults>
</compile_context>

<pallas_src>
import jax
import jax.numpy as jnp
from jax.experimental import pallas as pl
from jax.experimental.pallas import tpu as pltpu

CRITIC_OBS = [20, 20, 7]
N_ACTIONS = 5
HIDDEN = 128
ATTN_FEATURES = 64

IN_DIM = CRITIC_OBS[0] + CRITIC_OBS[1] + N_ACTIONS   # 45
SUR_DIM = CRITIC_OBS[2]                              # 7
ATTN_IN = HIDDEN + SUR_DIM                           # 135

MAX_BATCH_TILE = 4096                 # comfortably fits VMEM on v5e/v6e/v7x with bf16 streams
VMEM_LIMIT_BYTES = 48 * 1024 * 1024   # below v7x's 64 MiB physical VMEM, above v5e's 16 MiB default
TILE_GRAN = 16                        # bf16 sublane packing granularity


def _round_up(n, m):
    return ((n + m - 1) // m) * m


def _agent_kernel(obs_ref, sur_ref, w1_ref, b1_ref, w2_ref, b2_ref, out_ref, comb_ref):
    # Linear(45 -> 128) + ReLU: bf16 MXU matmul, f32 accumulation + f32 epilogue.
    h = jnp.dot(obs_ref[...], w1_ref[...], preferred_element_type=jnp.float32)
    h = jnp.maximum(h + b1_ref[...], 0.0)

    # Assemble [h | sur] (135 lanes) in a bf16 VMEM scratch.
    # Both placements are lane-aligned (offsets 0 and 128) -> no cross-lane shuffle.
    comb_ref[:, :HIDDEN] = h.astype(jnp.bfloat16)
    comb_ref[:, HIDDEN:] = sur_ref[...]

    # attention_fc: single bf16 matmul over the full 135-wide combined input.
    out = jnp.dot(comb_ref[...], w2_ref[...], preferred_element_type=jnp.float32)
    out_ref[...] = (out + b2_ref[...]).astype(out_ref.dtype)


def custom_agent_layer(obsWact, sur_nei_obs, params, *, batch_tile=MAX_BATCH_TILE):
    """obsWact: [B, 45], sur_nei_obs: [B, 7]  ->  [B, ATTN_FEATURES] f32."""
    B = obsWact.shape[0]
    w1_t, b1, w2_t, b2 = params

    # bf16 activations / weights from HBM (halves input DMA); biases stay f32 for the epilogue.
    obs = obsWact.astype(jnp.bfloat16)
    sur = sur_nei_obs.astype(jnp.bfloat16)
    w1 = w1_t.astype(jnp.bfloat16)
    w2 = w2_t.astype(jnp.bfloat16)
    b1 = b1.astype(jnp.float32).reshape(1, HIDDEN)
    b2 = b2.astype(jnp.float32).reshape(1, ATTN_FEATURES)

    # Batch tile: multiple of TILE_GRAN, capped, and chosen so that there are >= 2 grid steps
    # whenever B allows (so the "parallel" axis actually feeds both v7x TensorCores).
    batch_tile = max(TILE_GRAN, _round_up(batch_tile, TILE_GRAN))
    b_aligned = _round_up(B, TILE_GRAN)
    if b_aligned >= 2 * TILE_GRAN:
        tb = min(batch_tile, _round_up(pl.cdiv(b_aligned, 2), TILE_GRAN))
    else:
        tb = b_aligned

    b_pad = _round_up(B, tb)
    if b_pad != B:
        obs = jnp.pad(obs, ((0, b_pad - B), (0, 0)))
        sur = jnp.pad(sur, ((0, b_pad - B), (0, 0)))

    grid = (b_pad // tb,)

    out = pl.pallas_call(
        _agent_kernel,
        out_shape=jax.ShapeDtypeStruct((b_pad, ATTN_FEATURES), jnp.float32),
        grid=grid,
        in_specs=[
            pl.BlockSpec((tb, IN_DIM), lambda i: (i, 0)),              # obsWact tiles (bf16)
            pl.BlockSpec((tb, SUR_DIM), lambda i: (i, 0)),             # sur_nei_obs tiles (bf16)
            pl.BlockSpec((IN_DIM, HIDDEN), lambda i: (0, 0)),          # W1 (VMEM-resident)
            pl.BlockSpec((1, HIDDEN), lambda i: (0, 0)),               # b1 (resident)
            pl.BlockSpec((ATTN_IN, ATTN_FEATURES), lambda i: (0, 0)),  # W2 full 135x64 (resident)
            pl.BlockSpec((1, ATTN_FEATURES), lambda i: (0, 0)),        # b2 (resident)
        ],
        out_specs=pl.BlockSpec((tb, ATTN_FEATURES), lambda i: (i, 0)),
        scratch_shapes=[pltpu.VMEM((tb, ATTN_IN), jnp.bfloat16)],      # [h | sur] staging buffer
        compiler_params=pltpu.CompilerParams(
            dimension_semantics=("parallel",),        # megacore sharding on v7x; no-op on v5e/v6e
            vmem_limit_bytes=VMEM_LIMIT_BYTES,
        ),
    )(obs, sur, w1, b1, w2, b2)

    return out[:B]


def init_params(key):
    """Deterministic init matching PyTorch Linear shapes (weights stored transposed, f32)."""
    k1, k2, k3, k4 = jax.random.split(key, 4)
    bound1 = 1.0 / jnp.sqrt(float(IN_DIM))
    bound2 = 1.0 / jnp.sqrt(float(ATTN_IN))
    # nn.Linear(45, 128): weight [128, 45] -> stored as [45, 128]
    w1_t = jax.random.uniform(k1, (IN_DIM, HIDDEN), jnp.float32, -bound1, bound1)
    b1 = jax.random.uniform(k2, (1, HIDDEN), jnp.float32, -bound1, bound1)
    # nn.Linear(135, ATTN): weight [ATTN, 135] -> stored as [135, ATTN]
    w2_t = jax.random.uniform(k3, (ATTN_IN, ATTN_FEATURES), jnp.float32, -bound2, bound2)
    b2 = jax.random.uniform(k4, (1, ATTN_FEATURES), jnp.float32, -bound2, bound2)
    return w1_t, b1, w2_t, b2


def reference(obsWact, sur_nei_obs, params):
    """Full-f32 reference of the module's forward pass."""
    w1_t, b1, w2_t, b2 = params
    h = jnp.maximum(obsWact @ w1_t + b1, 0.0)
    combined = jnp.concatenate([h, sur_nei_obs], axis=-1)
    return combined @ w2_t + b2


if __name__ == "__main__":
    key = jax.random.PRNGKey(0)
    kp, ko, ks, ko2, ks2 = jax.random.split(key, 5)

    params = init_params(kp)

    # bf16 matmuls with f32 accumulation -> compare against the f32 reference with a loose-but-
    # meaningful tolerance (values are O(0.3); bf16 rounding error here is ~1e-2 worst case).
    TOL = 5e-2

    # Small case (single tile).
    B = 8
    obsWact = jax.random.normal(ko, (B, IN_DIM), jnp.float32)
    sur_nei_obs = jax.random.normal(ks, (B, SUR_DIM), jnp.float32)
    out = jax.block_until_ready(custom_agent_layer(obsWact, sur_nei_obs, params))
    ref = reference(obsWact, sur_nei_obs, params)
    assert out.shape == (B, ATTN_FEATURES)
    assert float(jnp.max(jnp.abs(out - ref))) < TOL

    # Non-multiple-of-tile batch (exercises padding / multi-step grid path).
    B2 = 37
    obsWact2 = jax.random.normal(ko2, (B2, IN_DIM), jnp.float32)
    sur_nei_obs2 = jax.random.normal(ks2, (B2, SUR_DIM), jnp.float32)
    out2 = jax.block_until_ready(
        custom_agent_layer(obsWact2, sur_nei_obs2, params, batch_tile=16)
    )
    ref2 = reference(obsWact2, sur_nei_obs2, params)
    assert out2.shape == (B2, ATTN_FEATURES)
    assert float(jnp.max(jnp.abs(out2 - ref2))) < TOL

    print("KERNEL_OK")
</pallas_src>

<mosaic_0001>
module attributes {stable_mosaic.version = 11 : i64} {
  func.func @_agent_kernel(%arg0: i32, %arg1: memref<16x45xbf16, #tpu.memory_space<vmem>>, %arg2: memref<16x7xbf16, #tpu.memory_space<vmem>>, %arg3: memref<45x128xbf16, #tpu.memory_space<vmem>>, %arg4: memref<1x128xf32, #tpu.memory_space<vmem>>, %arg5: memref<135x64xbf16, #tpu.memory_space<vmem>>, %arg6: memref<1x64xf32, #tpu.memory_space<vmem>>, %arg7: memref<16x64xf32, #tpu.memory_space<vmem>>, %arg8: memref<16x135xbf16, #tpu.memory_space<vmem>>) attributes {dimension_semantics = [#tpu.dimension_semantics<parallel>], iteration_bounds = array<i64: 1>, scalar_prefetch = 0 : i64, scratch_operands = 1 : i64, tpu.core_type = #tpu.core_type<tc>, window_params = [{transform_indices = @transform_0, window_bounds = array<i64: 16, 45>}, {transform_indices = @transform_1, window_bounds = array<i64: 16, 7>}, {pipeline_mode = #tpu.pipeline_mode<synchronous>, transform_indices = @transform_2, window_bounds = array<i64: 45, 128>}, {pipeline_mode = #tpu.pipeline_mode<synchronous>, transform_indices = @transform_3, window_bounds = array<i64: 1, 128>}, {pipeline_mode = #tpu.pipeline_mode<synchronous>, transform_indices = @transform_4, window_bounds = array<i64: 135, 64>}, {pipeline_mode = #tpu.pipeline_mode<synchronous>, transform_indices = @transform_5, window_bounds = array<i64: 1, 64>}, {transform_indices = @transform_6, window_bounds = array<i64: 16, 64>}]} {
    %c0 = arith.constant 0 : index
    %c0_0 = arith.constant 0 : index
    %0 = vector.load %arg1[%c0, %c0_0] : memref<16x45xbf16, #tpu.memory_space<vmem>>, vector<16x45xbf16>
    %c0_1 = arith.constant 0 : index
    %c0_2 = arith.constant 0 : index
    %1 = vector.load %arg3[%c0_1, %c0_2] : memref<45x128xbf16, #tpu.memory_space<vmem>>, vector<45x128xbf16>
    %cst = arith.constant dense<0.000000e+00> : vector<16x128xf32>
    %2 = tpu.matmul %0, %1, %cst {dimension_numbers = #tpu.dot_dimension_numbers<[1], [0], [0], [1], [0, 0, 1, 1], [], []>} : vector<16x45xbf16>, vector<45x128xbf16>, vector<16x128xf32> -> vector<16x128xf32>
    %c0_3 = arith.constant 0 : index
    %c0_4 = arith.constant 0 : index
    %3 = vector.load %arg4[%c0_3, %c0_4] : memref<1x128xf32, #tpu.memory_space<vmem>>, vector<1x128xf32>
    %4 = vector.broadcast %3 : vector<1x128xf32> to vector<16x128xf32>
    %5 = arith.addf %2, %4 : vector<16x128xf32>
    %cst_5 = arith.constant 0.000000e+00 : f32
    %6 = vector.broadcast %cst_5 : f32 to vector<16x128xf32>
    %7 = arith.maximumf %5, %6 : vector<16x128xf32>
    %8 = arith.truncf %7 : vector<16x128xf32> to vector<16x128xbf16>
    %c0_6 = arith.constant 0 : index
    %c0_7 = arith.constant 0 : index
    %9 = vector.load %arg8[%c0_6, %c0_7] : memref<16x135xbf16, #tpu.memory_space<vmem>>, vector<16x128xbf16>
    tpu.vector_store %arg8[%c0_6, %c0_7], %8 {strides = array<i32>} : memref<16x135xbf16, #tpu.memory_space<vmem>>, vector<16x128xbf16>,
    %c0_8 = arith.constant 0 : index
    %c0_9 = arith.constant 0 : index
    %10 = vector.load %arg2[%c0_8, %c0_9] : memref<16x7xbf16, #tpu.memory_space<vmem>>, vector<16x7xbf16>
    %c0_10 = arith.constant 0 : index
    %c128 = arith.constant 128 : index
    %11 = vector.load %arg8[%c0_10, %c128] : memref<16x135xbf16, #tpu.memory_space<vmem>>, vector<16x7xbf16>
    tpu.vector_store %arg8[%c0_10, %c128], %10 {strides = array<i32>} : memref<16x135xbf16, #tpu.memory_space<vmem>>, vector<16x7xbf16>,
    %c0_11 = arith.constant 0 : index
    %c0_12 = arith.constant 0 : index
    %12 = vector.load %arg8[%c0_11, %c0_12] : memref<16x135xbf16, #tpu.memory_space<vmem>>, vector<16x135xbf16>
    %c0_13 = arith.constant 0 : index
    %c0_14 = arith.constant 0 : index
    %13 = vector.load %arg5[%c0_13, %c0_14] : memref<135x64xbf16, #tpu.memory_space<vmem>>, vector<135x64xbf16>
    %cst_15 = arith.constant dense<0.000000e+00> : vector<16x64xf32>
    %14 = tpu.matmul %12, %13, %cst_15 {dimension_numbers = #tpu.dot_dimension_numbers<[1], [0], [0], [1], [0, 0, 1, 1], [], []>} : vector<16x135xbf16>, vector<135x64xbf16>, vector<16x64xf32> -> vector<16x64xf32>
    %c0_16 = arith.constant 0 : index
    %c0_17 = arith.constant 0 : index
    %15 = vector.load %arg6[%c0_16, %c0_17] : memref<1x64xf32, #tpu.memory_space<vmem>>, vector<1x64xf32>
    %16 = vector.broadcast %15 : vector<1x64xf32> to vector<16x64xf32>
    %17 = arith.addf %14, %16 : vector<16x64xf32>
    %c0_18 = arith.constant 0 : index
    %c0_19 = arith.constant 0 : index
    %18 = vector.load %arg7[%c0_18, %c0_19] : memref<16x64xf32, #tpu.memory_space<vmem>>, vector<16x64xf32>
    tpu.vector_store %arg7[%c0_18, %c0_19], %17 {strides = array<i32>} : memref<16x64xf32, #tpu.memory_space<vmem>>, vector<16x64xf32>,
    return
  }
  func.func @transform_0(%arg0: i32) -> (i32, i32) {
    %c0_i32 = arith.constant 0 : i32
    %c0_i32_0 = arith.constant 0 : i32
    return %arg0, %c0_i32 : i32, i32
  }
  func.func @transform_1(%arg0: i32) -> (i32, i32) {
    %c0_i32 = arith.constant 0 : i32
    %c0_i32_0 = arith.constant 0 : i32
    return %arg0, %c0_i32 : i32, i32
  }
  func.func @transform_2(%arg0: i32) -> (i32, i32) {
    %c0_i32 = arith.constant 0 : i32
    %c0_i32_0 = arith.constant 0 : i32
    %c0_i32_1 = arith.constant 0 : i32
    return %c0_i32, %c0_i32_0 : i32, i32
  }
  func.func @transform_3(%arg0: i32) -> (i32, i32) {
    %c0_i32 = arith.constant 0 : i32
    %c0_i32_0 = arith.constant 0 : i32
    %c0_i32_1 = arith.constant 0 : i32
    return %c0_i32, %c0_i32_0 : i32, i32
  }
  func.func @transform_4(%arg0: i32) -> (i32, i32) {
    %c0_i32 = arith.constant 0 : i32
    %c0_i32_0 = arith.constant 0 : i32
    %c0_i32_1 = arith.constant 0 : i32
    return %c0_i32, %c0_i32_0 : i32, i32
  }
  func.func @transform_5(%arg0: i32) -> (i32, i32) {
    %c0_i32 = arith.constant 0 : i32
    %c0_i32_0 = arith.constant 0 : i32
    %c0_i32_1 = arith.constant 0 : i32
    return %c0_i32, %c0_i32_0 : i32, i32
  }
  func.func @transform_6(%arg0: i32) -> (i32, i32) {
    %c0_i32 = arith.constant 0 : i32
    %c0_i32_0 = arith.constant 0 : i32
    return %arg0, %c0_i32 : i32, i32
  }
}

</mosaic_0001>

<llo_original>
// kernel: tpu_custom_call.1
$region0: #{tpu_custom_call.1}
  #allocation0 [shape = 'u32[]', space=smem, size = 0x4, offset = 0x4, fixed_abs, tag = 'smem constant byte address 0x4 - core index']
  #allocation1 [shape = 'u32[144,128]{1,0:T(1,128)}', space=vmem, size = 0x12000, scoped, tag = 'internal scratch']
  #allocation2 [shape = 'bf16[16,135]{1,0:T(8,128)(2,1)}', space=vmem, size = 0x2000, scoped, tag = 'scratch operand']
  %s0 = inlined_call_operand.vmem [shape: bf16[16,45], index: 0, kind: input, shape index: {}]
  %s1 = inlined_call_operand.vmem [shape: bf16[16,7], index: 1, kind: input, shape index: {}]
  %s2 = inlined_call_operand.vmem [shape: bf16[45,128], index: 2, kind: input, shape index: {}]
  %s3 = inlined_call_operand.vmem [shape: f32[1,128], index: 3, kind: input, shape index: {}]
  %s4 = inlined_call_operand.vmem [shape: bf16[135,64], index: 4, kind: input, shape index: {}]
  %s5 = inlined_call_operand.vmem [shape: f32[1,64], index: 5, kind: input, shape index: {}]
  %s6 = inlined_call_operand.hbm [shape: f32[16,64], index: 6, kind: output, shape index: {}]
  %s7 = sld [smem:[#allocation0]]
  $region34: #{tpu_custom_call.1} parent=0
    _
  %s9 = ssub.s32 1, %s7
  %s10 = scalar_select 0, %s9, %s7
  $region1: #{tpu_custom_call.1} parent=0
    #allocation3 [shape = 'u8[8192]{0}', space=vmem, size = 0x2000, scoped, tag = 'output window, operand 0, single buffered']
    #allocation4 [shape = 's32[1]{0}', space=sflag, size = 0x4, scoped, tag = 'scoped memory for tpu_custom_call.1']
    %11 = vsyncpa [#allocation4], 0
    // Predicated region
    $region2: #{tpu_custom_call.1} parent=1 // pred_check
      _
    $region3: #{tpu_custom_call.1} parent=1 // pred_check_branch
      %13 = sbr.rel (0) target = $region5
    $region4: #{tpu_custom_call.1} parent=1 // pred_region
      _
    $region5: #{tpu_custom_call.1} parent=1 // pred_fallthru
      _
    // Predicated region
    $region6: #{tpu_custom_call.1} parent=1 // pred_check
      _
    $region7: #{tpu_custom_call.1} parent=1 // pred_check_branch
      %15 = sbr.rel (0) target = $region9
    $region8: #{tpu_custom_call.1} parent=1 // pred_region
      _
    $region9: #{tpu_custom_call.1} parent=1 // pred_fallthru
      _
    // Predicated region
    $region10: #{tpu_custom_call.1} parent=1 // pred_check
      _
    $region11: #{tpu_custom_call.1} parent=1 // pred_check_branch
      %17 = sbr.rel (0) target = $region13
    $region12: #{tpu_custom_call.1} parent=1 // pred_region
      _
    $region13: #{tpu_custom_call.1} parent=1 // pred_fallthru
      _
    // Predicated region
    $region14: #{tpu_custom_call.1} parent=1 // pred_check
      _
    $region15: #{tpu_custom_call.1} parent=1 // pred_check_branch
      %19 = sbr.rel (0) target = $region17
    $region16: #{tpu_custom_call.1} parent=1 // pred_region
      _
    $region17: #{tpu_custom_call.1} parent=1 // pred_fallthru
      _
    // Predicated region
    $region18: #{tpu_custom_call.1} parent=1 // pred_check
      _
    $region19: #{tpu_custom_call.1} parent=1 // pred_check_branch
      %21 = sbr.rel (0) target = $region21
    $region20: #{tpu_custom_call.1} parent=1 // pred_region
      _
    $region21: #{tpu_custom_call.1} parent=1 // pred_fallthru
      _
    // Predicated region
    $region22: #{tpu_custom_call.1} parent=1 // pred_check
      _
    $region23: #{tpu_custom_call.1} parent=1 // pred_check_branch
      %23 = sbr.rel (0) target = $region25
    $region24: #{tpu_custom_call.1} parent=1 // pred_region
      _
    $region25: #{tpu_custom_call.1} parent=1 // pred_fallthru
      _
    %v25 = vld [vmem:[%s0] sm:$0xf]
    %v26 = vld [vmem:[%s0 + $0x4] sm:$0xf]
    %v27 = vld [vmem:[%s2] sm:$0xf]
    %v28 = vld [vmem:[%s2 + $0x4] sm:$0xf]
    %v29 = vld [vmem:[%s2 + $0x8] sm:$0xf]
    %v30 = vld [vmem:[%s2 + $0xc] sm:$0xf]
    %v31 = vld [vmem:[%s2 + $0x10] sm:$0xf]
    %v32 = vld [vmem:[%s2 + $0x14] sm:$0x7]
    %v33 = vld [vmem:[%s3] sm:$0x1]
    %v35 = vlaneseq
    %v36 = vshrl.u32 %v35, 7
    %v37 = vsub.s32 0, %v36
    %v38 = vrot.slane %v33, %v37
    %v42 = vunpack.c.l.b16 %v25
    %v43 = vunpack.c.l.b16 %v26
    %v44 = vpack.c.b16 %v43, %v42
    %v51 = vunpack.c.l.b16 %v27
    %v52 = vunpack.c.l.b16 %v28
    %v53 = vunpack.c.l.b16 %v29
    %v54 = vunpack.c.l.b16 %v30
    %v55 = vunpack.c.l.b16 %v31
    %v56 = vunpack.c.l.b16 %v32
    %v57 = vpack.c.b16 %v52, %v51
    %v58 = vpack.c.b16 %v54, %v53
    %v59 = vpack.c.b16 %v56, %v55
    %vm62 = vcmask 367616
    %v64 = vsel %vm62, %v44, 0
    %vm66 = vcmask 1045504
    %vm67 = vcmask 1046528
    %v68 = vsel %vm66, 4294967295, 65535
    %v69 = vsel %vm67, %v68, 0
    %v71 = vand.u32 %v59, %v69
    %73 = vmatprep.subr.bf16.mxu0 0
    %74 = vmatpush1.bf16.msra.mxu0 0
    %75 = vmatprep.subr.bf16.mxu0 0
    %76 = vmatpush1.bf16.msra.mxu0 0
    %77 = vmatprep.subr.bf16.mxu0 0
    %78 = vmatpush1.bf16.msra.mxu0 0
    %79 = vmatprep.subr.bf16.mxu0 0
    %80 = vmatpush1.bf16.msra.mxu0 0
    %81 = vmatprep.subr.bf16.mxu0 0
    %82 = vmatpush1.bf16.msra.mxu0 0
    %83 = vmatprep.subr.bf16.mxu0 0
    %84 = vmatpush1.bf16.msra.mxu0 %v71
    %85 = vmatprep.subr.bf16.mxu0 0
    %86 = vmatpush1.bf16.msra.mxu0 %v58
    %87 = vmatprep.subr.bf16.mxu0 0
    %88 = vmatpush1.bf16.msra.mxu0 %v57
    %89 = vmatprep.subr.bf16.mxu0 0
    %90 = vmatpush2.bf16.msra.mxu0 0
    %91 = vmatprep.subr.bf16.mxu0 0
    %92 = vmatpush2.bf16.msra.mxu0 0
    %93 = vmatprep.subr.bf16.mxu0 0
    %94 = vmatpush2.bf16.msra.mxu0 0
    %95 = vmatprep.subr.bf16.mxu0 0
    %96 = vmatpush2.bf16.msra.mxu0 0
    %97 = vmatprep.subr.bf16.mxu0 0
    %98 = vmatpush2.bf16.msra.mxu0 0
    %99 = vmatprep.subr.bf16.mxu0 0
    %100 = vmatpush2.bf16.msra.mxu0 0
    %101 = vmatprep.subr.bf16.mxu0 0
    %102 = vmatpush2.bf16.msra.mxu0 0
    %103 = vmatprep.subr.bf16.mxu0 0
    %104 = vmatpush2.bf16.msra.mxu0 0
    %105 = vmatprep.mubr.bf16.mxu0 0
    %106 = vmatmul.mubr.bf16.gmra.mxu0 %v64
    %v107 = vpop.f32.mrf.mxu0
    %v108 = vadd.f32 %v38, %v107
    %v109 = vpop.f32.mrf.mxu0
    %v110 = vpop.f32.mrf.mxu0
    %v111 = vadd.f32 %v38, %v110
    %v112 = vpop.f32.mrf.mxu0
    %113 = vdwg.mxu0
    %v114 = vmax.f32 %v108, 0.0
    %v115 = vmax.f32 %v111, 0.0
    %v116 = vpack.c.bf16 %v115, %v114
    %v118 = vunpack.c.l.b16 %v116
    %v119 = vunpack.c.h.b16 %v116
    %v120 = vpack.c.b16 %v118, %v118
    %v121 = vpack.c.b16 %v119, %v119
    %124 = vst [vmem:[#allocation2] sm:$0xf] %v120
    %125 = vst [vmem:[#allocation2 + $0x8] sm:$0xf] %v121
    %v126 = vld [vmem:[%s1] sm:$0xf]
    %v127 = vld [vmem:[%s1 + $0x4] sm:$0xf]
    %vm128 = vcmask 52224
    %129 = vst.msk [vmem:[#allocation2 + $0x4] sm:$0xf] %vm128, %v126
    %130 = vst.msk [vmem:[#allocation2 + $0xc] sm:$0xf] %vm128, %v127
    %v131 = vld [vmem:[#allocation2] sm:$0xff]
    %v132 = vld [vmem:[#allocation2 + $0x8] sm:$0xff]
    %v133 = vld [vmem:[%s4] sm:$0xf]
    %v134 = vld [vmem:[%s4 + $0x4] sm:$0xf]
    %v135 = vld [vmem:[%s4 + $0x8] sm:$0xf]
    %v136 = vld [vmem:[%s4 + $0xc] sm:$0xf]
    %v137 = vld [vmem:[%s4 + $0x10] sm:$0xf]
    %v138 = vld [vmem:[%s4 + $0x14] sm:$0xf]
    %v139 = vld [vmem:[%s4 + $0x18] sm:$0xf]
    %v140 = vld [vmem:[%s4 + $0x1c] sm:$0xf]
    %v141 = vld [vmem:[%s4 + $0x20] sm:$0xf]
    %v142 = vld [vmem:[%s4 + $0x24] sm:$0xf]
    %v143 = vld [vmem:[%s4 + $0x28] sm:$0xf]
    %v144 = vld [vmem:[%s4 + $0x2c] sm:$0xf]
    %v145 = vld [vmem:[%s4 + $0x30] sm:$0xf]
    %v146 = vld [vmem:[%s4 + $0x34] sm:$0xf]
    %v147 = vld [vmem:[%s4 + $0x38] sm:$0xf]
    %v148 = vld [vmem:[%s4 + $0x3c] sm:$0xf]
    %v149 = vld [vmem:[%s4 + $0x40] sm:$0xf]
    %v150 = vld [vmem:[%s5] sm:$0x1]
    %v152 = vlaneseq
    %v153 = vshrl.u32 %v152, 7
    %v154 = vsub.s32 0, %v153
    %v155 = vrot.slane %v150, %v154
    %v159 = vunpack.c.l.b16 %v131
    %v160 = vunpack.c.h.b16 %v131
    %v161 = vunpack.c.l.b16 %v132
    %v162 = vunpack.c.h.b16 %v132
    %v163 = vpack.c.b16 %v161, %v159
    %v164 = vpack.c.b16 %v162, %v160
    %v183 = vunpack.c.l.b16 %v133
    %v184 = vunpack.c.l.b16 %v134
    %v185 = vunpack.c.l.b16 %v135
    %v186 = vunpack.c.l.b16 %v136
    %v187 = vunpack.c.l.b16 %v137
    %v188 = vunpack.c.l.b16 %v138
    %v189 = vunpack.c.l.b16 %v139
    %v190 = vunpack.c.l.b16 %v140
    %v191 = vunpack.c.l.b16 %v141
    %v192 = vunpack.c.l.b16 %v142
    %v193 = vunpack.c.l.b16 %v143
    %v194 = vunpack.c.l.b16 %v144
    %v195 = vunpack.c.l.b16 %v145
    %v196 = vunpack.c.l.b16 %v146
    %v197 = vunpack.c.l.b16 %v147
    %v198 = vunpack.c.l.b16 %v148
    %v199 = vunpack.c.l.b16 %v149
    %v200 = vpack.c.b16 %v184, %v183
    %v201 = vpack.c.b16 %v186, %v185
    %v202 = vpack.c.b16 %v188, %v187
    %v203 = vpack.c.b16 %v190, %v189
    %v204 = vpack.c.b16 %v192, %v191
    %v205 = vpack.c.b16 %v194, %v193
    %v206 = vpack.c.b16 %v196, %v195
    %v207 = vpack.c.b16 %v198, %v197
    %v208 = vpack.c.b16 %v199, %v199
    %vm217 = vcmask 56320
    %v219 = vsel %vm217, %v164, 0
    %vm221 = vcmask 1042432
    %vm222 = vcmask 1043456
    %v223 = vsel %vm221, 4294967295, 65535
    %v224 = vsel %vm222, %v223, 0
    %v226 = vand.u32 %v208, %v224
    %228 = vmatprep.subr.bf16.mxu0 0
    %229 = vmatpush1.bf16.msra.mxu0 %v207
    %230 = vmatprep.subr.bf16.mxu0 0
    %231 = vmatpush1.bf16.msra.mxu0 %v206
    %232 = vmatprep.subr.bf16.mxu0 0
    %233 = vmatpush1.bf16.msra.mxu0 %v205
    %234 = vmatprep.subr.bf16.mxu0 0
    %235 = vmatpush1.bf16.msra.mxu0 %v204
    %236 = vmatprep.subr.bf16.mxu0 0
    %237 = vmatpush1.bf16.msra.mxu0 %v203
    %238 = vmatprep.subr.bf16.mxu0 0
    %239 = vmatpush1.bf16.msra.mxu0 %v202
    %240 = vmatprep.subr.bf16.mxu0 0
    %241 = vmatpush1.bf16.msra.mxu0 %v201
    %242 = vmatprep.subr.bf16.mxu0 0
    %243 = vmatpush1.bf16.msra.mxu0 %v200
    %244 = vmatprep.subr.bf16.mxu0 0
    %245 = vmatpush2.bf16.msra.mxu0 0
    %246 = vmatprep.subr.bf16.mxu0 0
    %247 = vmatpush2.bf16.msra.mxu0 0
    %248 = vmatprep.subr.bf16.mxu0 0
    %249 = vmatpush2.bf16.msra.mxu0 0
    %250 = vmatprep.subr.bf16.mxu0 0
    %251 = vmatpush2.bf16.msra.mxu0 0
    %252 = vmatprep.subr.bf16.mxu0 0
    %253 = vmatpush2.bf16.msra.mxu0 0
    %254 = vmatprep.subr.bf16.mxu0 0
    %255 = vmatpush2.bf16.msra.mxu0 0
    %256 = vmatprep.subr.bf16.mxu0 0
    %257 = vmatpush2.bf16.msra.mxu0 0
    %258 = vmatprep.subr.bf16.mxu0 0
    %259 = vmatpush2.bf16.msra.mxu0 %v226
    %260 = vmatprep.mubr.bf16.mxu0 %v219
    %261 = vmatmul.mubr.bf16.gmra.mxu0 %v163
    %v262 = vpop.f32.mrf.mxu0
    %v263 = vadd.f32 %v155, %v262
    %v264 = vpop.f32.mrf.mxu0
    %v265 = vpop.f32.mrf.mxu0
    %v266 = vadd.f32 %v155, %v265
    %v267 = vpop.f32.mrf.mxu0
    %268 = vdwg.mxu0
    %vm269 = vcmask 523264
    %270 = vst.msk [vmem:[#allocation3] sm:$0xff] %vm269, %v263
    %271 = vst.msk [vmem:[#allocation3 + $0x8] sm:$0xff] %vm269, %v266
    // Predicated region
    $region26: #{tpu_custom_call.1} parent=1 // pred_check
      _
    $region27: #{tpu_custom_call.1} parent=1 // pred_check_branch
      %273 = sbr.rel (0) target = $region29
    $region28: #{tpu_custom_call.1} parent=1 // pred_region
      %s275 = ssub.s32 256, 256
      %276 = vsyncadd [#allocation4], %s275
      %s277 = sshll.u32 [#allocation3], 4
      %s278 = int_to_ptr.vmem [resolvable:$true] %s277
      %283 = dma.vmem_to_hbm [thread:$0]  %s278, 256, %s6, [#allocation4], 128, 128, 8
    $region29: #{tpu_custom_call.1} parent=1 // pred_fallthru
      _
    // Predicated region
    $region30: #{tpu_custom_call.1} parent=1 // pred_check
      _
    $region31: #{tpu_custom_call.1} parent=1 // pred_check_branch
      %285 = sbr.rel (0) target = $region33
    $region32: #{tpu_custom_call.1} parent=1 // pred_region
      %286 = dma.done [#allocation4], 256
    $region33: #{tpu_custom_call.1} parent=1 // pred_fallthru
      _
    %287 = vsyncpa [#allocation4], 1

</llo_original>
